<compile_context>
chip_gen: v5e
topology: v5e:2x2
jax: 0.10.0
libtpu: 0.0.40
codegen_flags: <defaults>
</compile_context>

<pallas_src>
import functools

import jax
import jax.numpy as jnp
from jax import lax
from jax.experimental import pallas as pl
from jax.experimental.pallas import tpu as pltpu


def _fused_conv_hsig_kernel(x_ref, w_ref, b_ref, o_ref, xpad_ref, stack_ref,
                            *, H, W, Cin, Cout, NB):
    """x_ref:     (NB, Cin, H*W)    flat images (lane axis = h*W + w)
       w_ref:     (Cout, 9*Cin)     fused weights, column index = tap*Cin + ci
       b_ref:     (Cout, 1)         bias with the hardsigmoid +3 folded in
       o_ref:     (NB, Cout, H*W)   channel-major output
       xpad_ref:  (Cin, HW+2W+2)    scratch: one flat, H-padded (+/-1) image
       stack_ref: (9*Cin, NB*HW)    scratch: im2col stack for the single dot
    """
    HW = H * W

    # Column-boundary masks: taps with kw==0 / kw==2 must not read across a row
    # boundary of the flat h*W+w layout (the W-axis zero padding is implicit).
    lane = lax.broadcasted_iota(jnp.int32, (1, HW), 1)
    if (W & (W - 1)) == 0:
        wpos = lane & (W - 1)          # W is a power of two -> cheap AND
    else:
        wpos = lane % W
    mask_l = jnp.broadcast_to(wpos != 0, (Cin, HW))        # kw==0 reads x[..,w-1]
    mask_r = jnp.broadcast_to(wpos != (W - 1), (Cin, HW))  # kw==2 reads x[..,w+1]

    # Zero the pad columns once; the data region is overwritten per image.
    xpad_ref[...] = jnp.zeros(xpad_ref.shape, xpad_ref.dtype)

    for i in range(NB):                                # static unroll over images
        xpad_ref[:, W + 1:W + 1 + HW] = x_ref[i]
        for kh in range(3):
            for kw in range(3):
                t = kh * 3 + kw
                s = kh * W + kw                        # static lane offset of tap
                xs = xpad_ref[:, s:s + HW]             # (Cin, HW) shifted view
                if kw == 0:
                    xs = jnp.where(mask_l, xs, 0.0)
                elif kw == 2:
                    xs = jnp.where(mask_r, xs, 0.0)
                stack_ref[t * Cin:(t + 1) * Cin, i * HW:(i + 1) * HW] = xs

    # Single fused MXU pass: (Cout, 27) x (27, NB*HW), f32 accumulation.
    acc = jnp.dot(w_ref[...], stack_ref[...], preferred_element_type=jnp.float32)
    acc = acc + b_ref[...]                             # bias (+3 already folded)

    # hardsigmoid epilogue: clamp to [0, 6], * 1/6.
    y = (jnp.clip(acc, 0.0, 6.0) * (1.0 / 6.0)).astype(o_ref.dtype)
    for i in range(NB):
        o_ref[i] = y[:, i * HW:(i + 1) * HW]           # 256-lane aligned slices


def _grid_config(batch):
    """2 parallel grid steps on dual-TensorCore chips (v7x); otherwise fold the
    whole batch into a single grid step (v5e/v6e are single-TC)."""
    try:
        kind = jax.devices()[0].device_kind.lower()
    except Exception:
        kind = ""
    n_tc = 2 if "7" in kind else 1
    g = n_tc if (batch % n_tc == 0 and batch >= n_tc) else 1
    return g, batch // g


@jax.jit
def conv_transpose_hardsigmoid(x, wt, bias):
    """x: (N, Cin, H, W) NCHW; wt: ConvTranspose2d weight (Cin, Cout, 3, 3); bias: (Cout,)."""
    N, Cin, H, W = x.shape
    Cout = wt.shape[1]
    HW = H * W
    L = HW + 2 * W + 2

    # ConvTranspose (stride=1, pad=1, k=3) == regular conv with spatially flipped
    # kernel, swapped channel dims, padding k-1-p = 1:
    #   w27[co, (kh*3+kw)*Cin + ci] = wt[ci, co, 2-kh, 2-kw]
    w9 = jnp.transpose(jnp.flip(wt, axis=(2, 3)), (2, 3, 1, 0))       # (3,3,Cout,Cin)
    w27 = (w9.reshape(9, Cout, Cin)
             .transpose(1, 0, 2)
             .reshape(Cout, 9 * Cin)
             .astype(jnp.float32))
    b3 = (bias + 3.0).reshape(Cout, 1).astype(jnp.float32)            # fold the +3

    # Free contiguous reshape -- no host-side padding, no extra HBM round trip.
    xflat = x.reshape(N, Cin, HW)

    G, NB = _grid_config(N)
    kernel = functools.partial(_fused_conv_hsig_kernel,
                               H=H, W=W, Cin=Cin, Cout=Cout, NB=NB)
    out = pl.pallas_call(
        kernel,
        out_shape=jax.ShapeDtypeStruct((N, Cout, HW), x.dtype),
        grid=(G,),
        in_specs=[
            pl.BlockSpec((NB, Cin, HW), lambda g: (g, 0, 0)),    # NB images / step
            pl.BlockSpec((Cout, 9 * Cin), lambda g: (0, 0)),     # fused weights
            pl.BlockSpec((Cout, 1), lambda g: (0, 0)),           # bias (+3)
        ],
        out_specs=pl.BlockSpec((NB, Cout, HW), lambda g: (g, 0, 0)),
        scratch_shapes=[
            pltpu.VMEM((Cin, L), jnp.float32),                   # padded flat image
            pltpu.VMEM((9 * Cin, NB * HW), jnp.float32),         # im2col stack
        ],
        compiler_params=pltpu.CompilerParams(
            dimension_semantics=("parallel",),
            vmem_limit_bytes=32 * 1024 * 1024,
        ),
    )(xflat, w27, b3)

    return out.reshape(N, Cout, H, W)   # already channel-major -> NCHW, no transpose


def _reference(x, wt, bias):
    """Pure-JAX reference for the same math (ConvTranspose2d + hardsigmoid)."""
    w_conv = jnp.transpose(jnp.flip(wt, axis=(2, 3)), (2, 3, 0, 1))   # (3,3,Cin,Cout) HWIO
    x_nhwc = jnp.transpose(x, (0, 2, 3, 1))
    y = lax.conv_general_dilated(
        x_nhwc, w_conv, window_strides=(1, 1), padding=((1, 1), (1, 1)),
        dimension_numbers=("NHWC", "HWIO", "NHWC"),
        precision=lax.Precision.HIGHEST)
    y = y + bias.reshape(1, 1, 1, -1)
    y = jnp.clip(y + 3.0, 0.0, 6.0) / 6.0
    return jnp.transpose(y, (0, 3, 1, 2))


if __name__ == "__main__":
    key = jax.random.PRNGKey(0)
    k_x, k_w, k_b = jax.random.split(key, 3)

    # Small shapes consistent with the module: ConvTranspose2d expects Cin=3.
    N, Cin, Cout, H, W = 2, 3, 8, 16, 16
    x = jax.random.normal(k_x, (N, Cin, H, W), dtype=jnp.float32)
    # ConvTranspose2d weight layout: (in_channels, out_channels, kH, kW)
    wt = jax.random.normal(k_w, (Cin, Cout, 3, 3), dtype=jnp.float32) * 0.1
    bias = jax.random.normal(k_b, (Cout,), dtype=jnp.float32) * 0.1

    out = jax.block_until_ready(conv_transpose_hardsigmoid(x, wt, bias))
    ref = jax.block_until_ready(_reference(x, wt, bias))

    assert out.shape == (N, Cout, H, W)
    assert jnp.allclose(out, ref, atol=1e-5, rtol=1e-5), "mismatch vs reference"

    print("KERNEL_OK")
</pallas_src>

<mosaic_0001>
module attributes {stable_mosaic.version = 11 : i64} {
  func.func @_fused_conv_hsig_kernel(%arg0: i32, %arg1: memref<2x3x256xf32, #tpu.memory_space<vmem>>, %arg2: memref<8x27xf32, #tpu.memory_space<vmem>>, %arg3: memref<8x1xf32, #tpu.memory_space<vmem>>, %arg4: memref<2x8x256xf32, #tpu.memory_space<vmem>>, %arg5: memref<3x290xf32, #tpu.memory_space<vmem>>, %arg6: memref<27x512xf32, #tpu.memory_space<vmem>>) attributes {dimension_semantics = [#tpu.dimension_semantics<parallel>], iteration_bounds = array<i64: 1>, scalar_prefetch = 0 : i64, scratch_operands = 2 : i64, tpu.core_type = #tpu.core_type<tc>, window_params = [{transform_indices = @transform_0, window_bounds = array<i64: 2, 3, 256>}, {pipeline_mode = #tpu.pipeline_mode<synchronous>, transform_indices = @transform_1, window_bounds = array<i64: 8, 27>}, {pipeline_mode = #tpu.pipeline_mode<synchronous>, transform_indices = @transform_2, window_bounds = array<i64: 8, 1>}, {transform_indices = @transform_3, window_bounds = array<i64: 2, 8, 256>}]} {
    %0 = tpu.iota {dimensions = array<i32: 1>} : vector<1x256xi32>
    %c15_i32 = arith.constant 15 : i32
    %1 = vector.broadcast %c15_i32 : i32 to vector<1x256xi32>
    %2 = arith.andi %0, %1 : vector<1x256xi32>
    %c0_i32 = arith.constant 0 : i32
    %3 = vector.broadcast %c0_i32 : i32 to vector<1x256xi32>
    %4 = arith.cmpi ne, %2, %3 : vector<1x256xi32>
    %5 = vector.shape_cast %4 : vector<1x256xi1> to vector<1x256xi1>
    %6 = vector.broadcast %5 : vector<1x256xi1> to vector<3x256xi1>
    %c15_i32_0 = arith.constant 15 : i32
    %7 = vector.broadcast %c15_i32_0 : i32 to vector<1x256xi32>
    %8 = arith.cmpi ne, %2, %7 : vector<1x256xi32>
    %9 = vector.shape_cast %8 : vector<1x256xi1> to vector<1x256xi1>
    %10 = vector.broadcast %9 : vector<1x256xi1> to vector<3x256xi1>
    %cst = arith.constant 0.000000e+00 : f32
    %11 = vector.broadcast %cst : f32 to vector<3x290xf32>
    %c0 = arith.constant 0 : index
    %c0_1 = arith.constant 0 : index
    %12 = vector.load %arg5[%c0, %c0_1] : memref<3x290xf32, #tpu.memory_space<vmem>>, vector<3x290xf32>
    tpu.vector_store %arg5[%c0, %c0_1], %11 {strides = array<i32>} : memref<3x290xf32, #tpu.memory_space<vmem>>, vector<3x290xf32>,
    %c0_2 = arith.constant 0 : index
    %c0_3 = arith.constant 0 : index
    %c0_4 = arith.constant 0 : index
    %13 = vector.load %arg1[%c0_2, %c0_3, %c0_4] : memref<2x3x256xf32, #tpu.memory_space<vmem>>, vector<1x3x256xf32>
    %14 = vector.shape_cast %13 : vector<1x3x256xf32> to vector<3x256xf32>
    %c0_5 = arith.constant 0 : index
    %c17 = arith.constant 17 : index
    %15 = vector.load %arg5[%c0_5, %c17] : memref<3x290xf32, #tpu.memory_space<vmem>>, vector<3x256xf32>
    tpu.vector_store %arg5[%c0_5, %c17], %14 {strides = array<i32>} : memref<3x290xf32, #tpu.memory_space<vmem>>, vector<3x256xf32>,
    %c0_6 = arith.constant 0 : index
    %c0_7 = arith.constant 0 : index
    %16 = vector.load %arg5[%c0_6, %c0_7] : memref<3x290xf32, #tpu.memory_space<vmem>>, vector<3x256xf32>
    %cst_8 = arith.constant 0.000000e+00 : f32
    %17 = vector.broadcast %cst_8 : f32 to vector<3x256xf32>
    %18 = arith.select %6, %16, %17 : vector<3x256xi1>, vector<3x256xf32>
    %c0_9 = arith.constant 0 : index
    %c0_10 = arith.constant 0 : index
    %19 = vector.load %arg6[%c0_9, %c0_10] : memref<27x512xf32, #tpu.memory_space<vmem>>, vector<3x256xf32>
    tpu.vector_store %arg6[%c0_9, %c0_10], %18 {strides = array<i32>} : memref<27x512xf32, #tpu.memory_space<vmem>>, vector<3x256xf32>,
    %c0_11 = arith.constant 0 : index
    %c1 = arith.constant 1 : index
    %20 = vector.load %arg5[%c0_11, %c1] : memref<3x290xf32, #tpu.memory_space<vmem>>, vector<3x256xf32>
    %c3 = arith.constant 3 : index
    %c0_12 = arith.constant 0 : index
    %21 = vector.load %arg6[%c3, %c0_12] : memref<27x512xf32, #tpu.memory_space<vmem>>, vector<3x256xf32>
    tpu.vector_store %arg6[%c3, %c0_12], %20 {strides = array<i32>} : memref<27x512xf32, #tpu.memory_space<vmem>>, vector<3x256xf32>,
    %c0_13 = arith.constant 0 : index
    %c2 = arith.constant 2 : index
    %22 = vector.load %arg5[%c0_13, %c2] : memref<3x290xf32, #tpu.memory_space<vmem>>, vector<3x256xf32>
    %cst_14 = arith.constant 0.000000e+00 : f32
    %23 = vector.broadcast %cst_14 : f32 to vector<3x256xf32>
    %24 = arith.select %10, %22, %23 : vector<3x256xi1>, vector<3x256xf32>
    %c6 = arith.constant 6 : index
    %c0_15 = arith.constant 0 : index
    %25 = vector.load %arg6[%c6, %c0_15] : memref<27x512xf32, #tpu.memory_space<vmem>>, vector<3x256xf32>
    tpu.vector_store %arg6[%c6, %c0_15], %24 {strides = array<i32>} : memref<27x512xf32, #tpu.memory_space<vmem>>, vector<3x256xf32>,
    %c0_16 = arith.constant 0 : index
    %c16 = arith.constant 16 : index
    %26 = vector.load %arg5[%c0_16, %c16] : memref<3x290xf32, #tpu.memory_space<vmem>>, vector<3x256xf32>
    %cst_17 = arith.constant 0.000000e+00 : f32
    %27 = vector.broadcast %cst_17 : f32 to vector<3x256xf32>
    %28 = arith.select %6, %26, %27 : vector<3x256xi1>, vector<3x256xf32>
    %c9 = arith.constant 9 : index
    %c0_18 = arith.constant 0 : index
    %29 = vector.load %arg6[%c9, %c0_18] : memref<27x512xf32, #tpu.memory_space<vmem>>, vector<3x256xf32>
    tpu.vector_store %arg6[%c9, %c0_18], %28 {strides = array<i32>} : memref<27x512xf32, #tpu.memory_space<vmem>>, vector<3x256xf32>,
    %c0_19 = arith.constant 0 : index
    %c17_20 = arith.constant 17 : index
    %30 = vector.load %arg5[%c0_19, %c17_20] : memref<3x290xf32, #tpu.memory_space<vmem>>, vector<3x256xf32>
    %c12 = arith.constant 12 : index
    %c0_21 = arith.constant 0 : index
    %31 = vector.load %arg6[%c12, %c0_21] : memref<27x512xf32, #tpu.memory_space<vmem>>, vector<3x256xf32>
    tpu.vector_store %arg6[%c12, %c0_21], %30 {strides = array<i32>} : memref<27x512xf32, #tpu.memory_space<vmem>>, vector<3x256xf32>,
    %c0_22 = arith.constant 0 : index
    %c18 = arith.constant 18 : index
    %32 = vector.load %arg5[%c0_22, %c18] : memref<3x290xf32, #tpu.memory_space<vmem>>, vector<3x256xf32>
    %cst_23 = arith.constant 0.000000e+00 : f32
    %33 = vector.broadcast %cst_23 : f32 to vector<3x256xf32>
    %34 = arith.select %10, %32, %33 : vector<3x256xi1>, vector<3x256xf32>
    %c15 = arith.constant 15 : index
    %c0_24 = arith.constant 0 : index
    %35 = vector.load %arg6[%c15, %c0_24] : memref<27x512xf32, #tpu.memory_space<vmem>>, vector<3x256xf32>
    tpu.vector_store %arg6[%c15, %c0_24], %34 {strides = array<i32>} : memref<27x512xf32, #tpu.memory_space<vmem>>, vector<3x256xf32>,
    %c0_25 = arith.constant 0 : index
    %c32 = arith.constant 32 : index
    %36 = vector.load %arg5[%c0_25, %c32] : memref<3x290xf32, #tpu.memory_space<vmem>>, vector<3x256xf32>
    %cst_26 = arith.constant 0.000000e+00 : f32
    %37 = vector.broadcast %cst_26 : f32 to vector<3x256xf32>
    %38 = arith.select %6, %36, %37 : vector<3x256xi1>, vector<3x256xf32>
    %c18_27 = arith.constant 18 : index
    %c0_28 = arith.constant 0 : index
    %39 = vector.load %arg6[%c18_27, %c0_28] : memref<27x512xf32, #tpu.memory_space<vmem>>, vector<3x256xf32>
    tpu.vector_store %arg6[%c18_27, %c0_28], %38 {strides = array<i32>} : memref<27x512xf32, #tpu.memory_space<vmem>>, vector<3x256xf32>,
    %c0_29 = arith.constant 0 : index
    %c33 = arith.constant 33 : index
    %40 = vector.load %arg5[%c0_29, %c33] : memref<3x290xf32, #tpu.memory_space<vmem>>, vector<3x256xf32>
    %c21 = arith.constant 21 : index
    %c0_30 = arith.constant 0 : index
    %41 = vector.load %arg6[%c21, %c0_30] : memref<27x512xf32, #tpu.memory_space<vmem>>, vector<3x256xf32>
    tpu.vector_store %arg6[%c21, %c0_30], %40 {strides = array<i32>} : memref<27x512xf32, #tpu.memory_space<vmem>>, vector<3x256xf32>,
    %c0_31 = arith.constant 0 : index
    %c34 = arith.constant 34 : index
    %42 = vector.load %arg5[%c0_31, %c34] : memref<3x290xf32, #tpu.memory_space<vmem>>, vector<3x256xf32>
    %cst_32 = arith.constant 0.000000e+00 : f32
    %43 = vector.broadcast %cst_32 : f32 to vector<3x256xf32>
    %44 = arith.select %10, %42, %43 : vector<3x256xi1>, vector<3x256xf32>
    %c24 = arith.constant 24 : index
    %c0_33 = arith.constant 0 : index
    %45 = vector.load %arg6[%c24, %c0_33] : memref<27x512xf32, #tpu.memory_space<vmem>>, vector<3x256xf32>
    tpu.vector_store %arg6[%c24, %c0_33], %44 {strides = array<i32>} : memref<27x512xf32, #tpu.memory_space<vmem>>, vector<3x256xf32>,
    %c1_34 = arith.constant 1 : index
    %c0_35 = arith.constant 0 : index
    %c0_36 = arith.constant 0 : index
    %46 = vector.load %arg1[%c1_34, %c0_35, %c0_36] : memref<2x3x256xf32, #tpu.memory_space<vmem>>, vector<1x3x256xf32>
    %47 = vector.shape_cast %46 : vector<1x3x256xf32> to vector<3x256xf32>
    %c0_37 = arith.constant 0 : index
    %c17_38 = arith.constant 17 : index
    %48 = vector.load %arg5[%c0_37, %c17_38] : memref<3x290xf32, #tpu.memory_space<vmem>>, vector<3x256xf32>
    tpu.vector_store %arg5[%c0_37, %c17_38], %47 {strides = array<i32>} : memref<3x290xf32, #tpu.memory_space<vmem>>, vector<3x256xf32>,
    %c0_39 = arith.constant 0 : index
    %c0_40 = arith.constant 0 : index
    %49 = vector.load %arg5[%c0_39, %c0_40] : memref<3x290xf32, #tpu.memory_space<vmem>>, vector<3x256xf32>
    %cst_41 = arith.constant 0.000000e+00 : f32
    %50 = vector.broadcast %cst_41 : f32 to vector<3x256xf32>
    %51 = arith.select %6, %49, %50 : vector<3x256xi1>, vector<3x256xf32>
    %c0_42 = arith.constant 0 : index
    %c256 = arith.constant 256 : index
    %52 = vector.load %arg6[%c0_42, %c256] : memref<27x512xf32, #tpu.memory_space<vmem>>, vector<3x256xf32>
    tpu.vector_store %arg6[%c0_42, %c256], %51 {strides = array<i32>} : memref<27x512xf32, #tpu.memory_space<vmem>>, vector<3x256xf32>,
    %c0_43 = arith.constant 0 : index
    %c1_44 = arith.constant 1 : index
    %53 = vector.load %arg5[%c0_43, %c1_44] : memref<3x290xf32, #tpu.memory_space<vmem>>, vector<3x256xf32>
    %c3_45 = arith.constant 3 : index
    %c256_46 = arith.constant 256 : index
    %54 = vector.load %arg6[%c3_45, %c256_46] : memref<27x512xf32, #tpu.memory_space<vmem>>, vector<3x256xf32>
    tpu.vector_store %arg6[%c3_45, %c256_46], %53 {strides = array<i32>} : memref<27x512xf32, #tpu.memory_space<vmem>>, vector<3x256xf32>,
    %c0_47 = arith.constant 0 : index
    %c2_48 = arith.constant 2 : index
    %55 = vector.load %arg5[%c0_47, %c2_48] : memref<3x290xf32, #tpu.memory_space<vmem>>, vector<3x256xf32>
    %cst_49 = arith.constant 0.000000e+00 : f32
    %56 = vector.broadcast %cst_49 : f32 to vector<3x256xf32>
    %57 = arith.select %10, %55, %56 : vector<3x256xi1>, vector<3x256xf32>
    %c6_50 = arith.constant 6 : index
    %c256_51 = arith.constant 256 : index
    %58 = vector.load %arg6[%c6_50, %c256_51] : memref<27x512xf32, #tpu.memory_space<vmem>>, vector<3x256xf32>
    tpu.vector_store %arg6[%c6_50, %c256_51], %57 {strides = array<i32>} : memref<27x512xf32, #tpu.memory_space<vmem>>, vector<3x256xf32>,
    %c0_52 = arith.constant 0 : index
    %c16_53 = arith.constant 16 : index
    %59 = vector.load %arg5[%c0_52, %c16_53] : memref<3x290xf32, #tpu.memory_space<vmem>>, vector<3x256xf32>
    %cst_54 = arith.constant 0.000000e+00 : f32
    %60 = vector.broadcast %cst_54 : f32 to vector<3x256xf32>
    %61 = arith.select %6, %59, %60 : vector<3x256xi1>, vector<3x256xf32>
    %c9_55 = arith.constant 9 : index
    %c256_56 = arith.constant 256 : index
    %62 = vector.load %arg6[%c9_55, %c256_56] : memref<27x512xf32, #tpu.memory_space<vmem>>, vector<3x256xf32>
    tpu.vector_store %arg6[%c9_55, %c256_56], %61 {strides = array<i32>} : memref<27x512xf32, #tpu.memory_space<vmem>>, vector<3x256xf32>,
    %c0_57 = arith.constant 0 : index
    %c17_58 = arith.constant 17 : index
    %63 = vector.load %arg5[%c0_57, %c17_58] : memref<3x290xf32, #tpu.memory_space<vmem>>, vector<3x256xf32>
    %c12_59 = arith.constant 12 : index
    %c256_60 = arith.constant 256 : index
    %64 = vector.load %arg6[%c12_59, %c256_60] : memref<27x512xf32, #tpu.memory_space<vmem>>, vector<3x256xf32>
    tpu.vector_store %arg6[%c12_59, %c256_60], %63 {strides = array<i32>} : memref<27x512xf32, #tpu.memory_space<vmem>>, vector<3x256xf32>,
    %c0_61 = arith.constant 0 : index
    %c18_62 = arith.constant 18 : index
    %65 = vector.load %arg5[%c0_61, %c18_62] : memref<3x290xf32, #tpu.memory_space<vmem>>, vector<3x256xf32>
    %cst_63 = arith.constant 0.000000e+00 : f32
    %66 = vector.broadcast %cst_63 : f32 to vector<3x256xf32>
    %67 = arith.select %10, %65, %66 : vector<3x256xi1>, vector<3x256xf32>
    %c15_64 = arith.constant 15 : index
    %c256_65 = arith.constant 256 : index
    %68 = vector.load %arg6[%c15_64, %c256_65] : memref<27x512xf32, #tpu.memory_space<vmem>>, vector<3x256xf32>
    tpu.vector_store %arg6[%c15_64, %c256_65], %67 {strides = array<i32>} : memref<27x512xf32, #tpu.memory_space<vmem>>, vector<3x256xf32>,
    %c0_66 = arith.constant 0 : index
    %c32_67 = arith.constant 32 : index
    %69 = vector.load %arg5[%c0_66, %c32_67] : memref<3x290xf32, #tpu.memory_space<vmem>>, vector<3x256xf32>
    %cst_68 = arith.constant 0.000000e+00 : f32
    %70 = vector.broadcast %cst_68 : f32 to vector<3x256xf32>
    %71 = arith.select %6, %69, %70 : vector<3x256xi1>, vector<3x256xf32>
    %c18_69 = arith.constant 18 : index
    %c256_70 = arith.constant 256 : index
    %72 = vector.load %arg6[%c18_69, %c256_70] : memref<27x512xf32, #tpu.memory_space<vmem>>, vector<3x256xf32>
    tpu.vector_store %arg6[%c18_69, %c256_70], %71 {strides = array<i32>} : memref<27x512xf32, #tpu.memory_space<vmem>>, vector<3x256xf32>,
    %c0_71 = arith.constant 0 : index
    %c33_72 = arith.constant 33 : index
    %73 = vector.load %arg5[%c0_71, %c33_72] : memref<3x290xf32, #tpu.memory_space<vmem>>, vector<3x256xf32>
    %c21_73 = arith.constant 21 : index
    %c256_74 = arith.constant 256 : index
    %74 = vector.load %arg6[%c21_73, %c256_74] : memref<27x512xf32, #tpu.memory_space<vmem>>, vector<3x256xf32>
    tpu.vector_store %arg6[%c21_73, %c256_74], %73 {strides = array<i32>} : memref<27x512xf32, #tpu.memory_space<vmem>>, vector<3x256xf32>,
    %c0_75 = arith.constant 0 : index
    %c34_76 = arith.constant 34 : index
    %75 = vector.load %arg5[%c0_75, %c34_76] : memref<3x290xf32, #tpu.memory_space<vmem>>, vector<3x256xf32>
    %cst_77 = arith.constant 0.000000e+00 : f32
    %76 = vector.broadcast %cst_77 : f32 to vector<3x256xf32>
    %77 = arith.select %10, %75, %76 : vector<3x256xi1>, vector<3x256xf32>
    %c24_78 = arith.constant 24 : index
    %c256_79 = arith.constant 256 : index
    %78 = vector.load %arg6[%c24_78, %c256_79] : memref<27x512xf32, #tpu.memory_space<vmem>>, vector<3x256xf32>
    tpu.vector_store %arg6[%c24_78, %c256_79], %77 {strides = array<i32>} : memref<27x512xf32, #tpu.memory_space<vmem>>, vector<3x256xf32>,
    %c0_80 = arith.constant 0 : index
    %c0_81 = arith.constant 0 : index
    %79 = vector.load %arg2[%c0_80, %c0_81] : memref<8x27xf32, #tpu.memory_space<vmem>>, vector<8x27xf32>
    %c0_82 = arith.constant 0 : index
    %c0_83 = arith.constant 0 : index
    %80 = vector.load %arg6[%c0_82, %c0_83] : memref<27x512xf32, #tpu.memory_space<vmem>>, vector<27x512xf32>
    %cst_84 = arith.constant dense<0.000000e+00> : vector<8x512xf32>
    %81 = tpu.matmul %79, %80, %cst_84 {dimension_numbers = #tpu.dot_dimension_numbers<[1], [0], [0], [1], [0, 0, 1, 1], [], []>} : vector<8x27xf32>, vector<27x512xf32>, vector<8x512xf32> -> vector<8x512xf32>
    %c0_85 = arith.constant 0 : index
    %c0_86 = arith.constant 0 : index
    %82 = vector.load %arg3[%c0_85, %c0_86] : memref<8x1xf32, #tpu.memory_space<vmem>>, vector<8x1xf32>
    %83 = vector.broadcast %82 : vector<8x1xf32> to vector<8x512xf32>
    %84 = arith.addf %81, %83 : vector<8x512xf32>
    %cst_87 = arith.constant 0.000000e+00 : f32
    %cst_88 = arith.constant 6.000000e+00 : f32
    %85 = vector.broadcast %cst_87 : f32 to vector<8x512xf32>
    %86 = arith.maximumf %85, %84 : vector<8x512xf32>
    %87 = vector.broadcast %cst_88 : f32 to vector<8x512xf32>
    %88 = arith.minimumf %87, %86 : vector<8x512xf32>
    %cst_89 = arith.constant 0.166666672 : f32
    %89 = vector.broadcast %cst_89 : f32 to vector<8x512xf32>
    %90 = arith.mulf %88, %89 : vector<8x512xf32>
    %91 = vector.extract_strided_slice %90 {offsets = [0, 0], sizes = [8, 256], strides = [1, 1]} : vector<8x512xf32> to vector<8x256xf32>
    %c0_90 = arith.constant 0 : index
    %c0_91 = arith.constant 0 : index
    %c0_92 = arith.constant 0 : index
    %92 = vector.load %arg4[%c0_90, %c0_91, %c0_92] : memref<2x8x256xf32, #tpu.memory_space<vmem>>, vector<1x8x256xf32>
    %93 = vector.shape_cast %92 : vector<1x8x256xf32> to vector<8x256xf32>
    %94 = vector.shape_cast %91 : vector<8x256xf32> to vector<1x8x256xf32>
    tpu.vector_store %arg4[%c0_90, %c0_91, %c0_92], %94 {strides = array<i32>} : memref<2x8x256xf32, #tpu.memory_space<vmem>>, vector<1x8x256xf32>,
    %95 = vector.extract_strided_slice %90 {offsets = [0, 256], sizes = [8, 256], strides = [1, 1]} : vector<8x512xf32> to vector<8x256xf32>
    %c1_93 = arith.constant 1 : index
    %c0_94 = arith.constant 0 : index
    %c0_95 = arith.constant 0 : index
    %96 = vector.load %arg4[%c1_93, %c0_94, %c0_95] : memref<2x8x256xf32, #tpu.memory_space<vmem>>, vector<1x8x256xf32>
    %97 = vector.shape_cast %96 : vector<1x8x256xf32> to vector<8x256xf32>
    %98 = vector.shape_cast %95 : vector<8x256xf32> to vector<1x8x256xf32>
    tpu.vector_store %arg4[%c1_93, %c0_94, %c0_95], %98 {strides = array<i32>} : memref<2x8x256xf32, #tpu.memory_space<vmem>>, vector<1x8x256xf32>,
    return
  }
  func.func @transform_0(%arg0: i32) -> (i32, i32, i32) {
    %c0_i32 = arith.constant 0 : i32
    %c0_i32_0 = arith.constant 0 : i32
    %c0_i32_1 = arith.constant 0 : i32
    return %arg0, %c0_i32, %c0_i32_0 : i32, i32, i32
  }
  func.func @transform_1(%arg0: i32) -> (i32, i32) {
    %c0_i32 = arith.constant 0 : i32
    %c0_i32_0 = arith.constant 0 : i32
    %c0_i32_1 = arith.constant 0 : i32
    return %c0_i32, %c0_i32_0 : i32, i32
  }
  func.func @transform_2(%arg0: i32) -> (i32, i32) {
    %c0_i32 = arith.constant 0 : i32
    %c0_i32_0 = arith.constant 0 : i32
    %c0_i32_1 = arith.constant 0 : i32
    return %c0_i32, %c0_i32_0 : i32, i32
  }
  func.func @transform_3(%arg0: i32) -> (i32, i32, i32) {
    %c0_i32 = arith.constant 0 : i32
    %c0_i32_0 = arith.constant 0 : i32
    %c0_i32_1 = arith.constant 0 : i32
    return %arg0, %c0_i32, %c0_i32_0 : i32, i32, i32
  }
}

</mosaic_0001>

<llo_original>
// kernel: conv_transpose_hardsigmoid.1
$region0: #{conv_transpose_hardsigmoid.1}
  #allocation0 [shape = 'u32[]', space=smem, size = 0x4, offset = 0x4, fixed_abs, tag = 'smem constant byte address 0x4 - core index']
  #allocation1 [shape = 'u32[72,128]{1,0:T(1,128)}', space=vmem, size = 0x9000, scoped, tag = 'internal scratch']
  #allocation2 [shape = 'f32[3,290]{1,0:T(4,128)}', space=vmem, size = 0x1800, scoped, tag = 'scratch operand']
  #allocation3 [shape = 'f32[27,512]{1,0:T(8,128)}', space=vmem, size = 0x10000, scoped, tag = 'scratch operand']
  %s0 = inlined_call_operand.vmem [shape: f32[2,3,256], index: 0, kind: input, shape index: {}]
  %s1 = inlined_call_operand.vmem [shape: f32[8,27], index: 1, kind: input, shape index: {}]
  %s2 = inlined_call_operand.vmem [shape: f32[8,1], index: 2, kind: input, shape index: {}]
  %s3 = inlined_call_operand.vmem [shape: f32[2,8,256], index: 3, kind: output, shape index: {}]
  %s4 = sld [smem:[#allocation0]]
  $region22: #{conv_transpose_hardsigmoid.1} parent=0
    _
  %s6 = ssub.s32 1, %s4
  %s7 = scalar_select 0, %s6, %s4
  // Predicated region
  $region2: #{conv_transpose_hardsigmoid.1} parent=0 // pred_check
    _
  $region3: #{conv_transpose_hardsigmoid.1} parent=0 // pred_check_branch
    %9 = sbr.rel (0) target = $region5
  $region4: #{conv_transpose_hardsigmoid.1} parent=0 // pred_region
    _
  $region5: #{conv_transpose_hardsigmoid.1} parent=0 // pred_fallthru
    _
  // Predicated region
  $region6: #{conv_transpose_hardsigmoid.1} parent=0 // pred_check
    _
  $region7: #{conv_transpose_hardsigmoid.1} parent=0 // pred_check_branch
    %11 = sbr.rel (0) target = $region9
  $region8: #{conv_transpose_hardsigmoid.1} parent=0 // pred_region
    _
  $region9: #{conv_transpose_hardsigmoid.1} parent=0 // pred_fallthru
    _
  // Predicated region
  $region10: #{conv_transpose_hardsigmoid.1} parent=0 // pred_check
    _
  $region11: #{conv_transpose_hardsigmoid.1} parent=0 // pred_check_branch
    %13 = sbr.rel (0) target = $region13
  $region12: #{conv_transpose_hardsigmoid.1} parent=0 // pred_region
    _
  $region13: #{conv_transpose_hardsigmoid.1} parent=0 // pred_fallthru
    _
  %v14 = vlaneseq
  %v15 = vand.u32 %v14, 127
  %v16 = vadd.s32 %v15, 128
  %v17 = vand.u32 %v15, 15
  %v18 = vand.u32 %v16, 15
  %vm19 = vcmp.ne.s32.totalorder %v17, 0
  %vm20 = vcmp.ne.s32.totalorder %v18, 0
  %v21 = vsel %vm19, 1, 0
  %v22 = vsel %vm20, 1, 0
  %vm23 = vcmp.eq.s32.totalorder %v21, 1
  %vm24 = vcmp.eq.s32.totalorder %v22, 1
  %vm25 = vcmp.ne.s32.totalorder %v17, 15
  %vm26 = vcmp.ne.s32.totalorder %v18, 15
  %v27 = vsel %vm25, 1, 0
  %v28 = vsel %vm26, 1, 0
  %vm29 = vcmp.eq.s32.totalorder %v27, 1
  %vm30 = vcmp.eq.s32.totalorder %v28, 1
  %31 = vst [vmem:[#allocation2] sm:$0x77] 0.0
  %vm32 = vcmask 272384
  %33 = vst.msk [vmem:[#allocation2 + $0x8] sm:$0x7] %vm32, 0.0
  %v34 = vld [vmem:[%s0] sm:$0x77]
  %36 = vrot.lane.b32.xlu0 %v34, 17
  %v37 = vpop.permute.xlu0 %36
  %v38 = vrot.slane %v37, 4
  %vm39 = vcmask 138240
  %v40 = vsel %vm39, %v38, %v37
  %vm43 = vcmask 1042568
  %vm44 = vcmask 1046532
  %vm45 = vmor %vm44, %vm43
  %46 = vst.msk [vmem:[#allocation2] sm:$0x77] %vm45, %v40
  %vm47 = vcmask 133120
  %48 = vst.msk [vmem:[#allocation2 + $0x8] sm:$0x7] %vm47, %v38
  %v49 = vld [vmem:[#allocation2] sm:$0x77]
  %51 = vst [vmem:[#allocation1] ss:$2 sm:$0xff] %v49
  %v52 = vld.sshfl [vmem:[#allocation1] sm:$0xff pattern:$0x75316420]
  %v53 = vld.sshfl [vmem:[#allocation1 + $0x8] sm:$0xff pattern:$0x75316420]
  %v56 = vsel %vm23, %v52, 0.0
  %v57 = vsel %vm24, %v53, 0.0
  %58 = vst [vmem:[#allocation3] sm:$0x7] %v56
  %59 = vst [vmem:[#allocation3 + $0x8] sm:$0x7] %v57
  %v60 = vld [vmem:[#allocation2] sm:$0x77]
  %v61 = vld [vmem:[#allocation2 + $0x8] sm:$0x7]
  %64 = vst [vmem:[#allocation1] ss:$2 sm:$0xff] %v60
  %s65 = scalar_lea.vmem [#allocation1], 16
  %66 = vst [vmem:[%s65] ss:$2 sm:$0xff] %v61
  %v67 = vld.sshfl [vmem:[#allocation1] sm:$0xff pattern:$0x75316420]
  %v68 = vld.sshfl [vmem:[#allocation1 + $0x8] sm:$0xff pattern:$0x75316420]
  %v69 = vld.sshfl [vmem:[#allocation1 + $0x10] sm:$0xff pattern:$0x75316420]
  %v70 = vrot.slane %v67, 5
  %v71 = vrot.slane %v68, 5
  %v72 = vrot.slane %v69, 5
  %73 = vrot.lane.b32.xlu0 %v70, 127
  %v74 = vpop.permute.xlu0 %73
  %75 = vrot.lane.b32.xlu0 %v71, 127
  %v76 = vpop.permute.xlu0 %75
  %77 = vrot.lane.b32.xlu0 %v72, 127
  %v78 = vpop.permute.xlu0 %77
  %vm79 = vcmask 1039360
  %v80 = vsel %vm79, %v74, %v76
  %v81 = vsel %vm79, %v76, %v78
  %84 = vst [vmem:[#allocation3] sm:$0x38] %v80
  %85 = vst [vmem:[#allocation3 + $0x8] sm:$0x38] %v81
  %v86 = vld [vmem:[#allocation2] sm:$0x77]
  %v87 = vld [vmem:[#allocation2 + $0x8] sm:$0x7]
  %90 = vst [vmem:[#allocation1] ss:$2 sm:$0xff] %v86
  %s91 = scalar_lea.vmem [#allocation1], 16
  %92 = vst [vmem:[%s91] ss:$2 sm:$0xff] %v87
  %v93 = vld.sshfl [vmem:[#allocation1] sm:$0xff pattern:$0x75316420]
  %v94 = vld.sshfl [vmem:[#allocation1 + $0x8] sm:$0xff pattern:$0x75316420]
  %v95 = vld.sshfl [vmem:[#allocation1 + $0x10] sm:$0xff pattern:$0x75316420]
  %96 = vrot.lane.b32.xlu0 %v93, 126
  %v97 = vpop.permute.xlu0 %96
  %98 = vrot.lane.b32.xlu0 %v94, 126
  %v99 = vpop.permute.xlu0 %98
  %100 = vrot.lane.b32.xlu0 %v95, 126
  %v101 = vpop.permute.xlu0 %100
  %vm102 = vcmask 1031168
  %v103 = vsel %vm102, %v97, %v99
  %v104 = vsel %vm102, %v99, %v101
  %v107 = vsel %vm29, %v103, 0.0
  %v108 = vsel %vm30, %v104, 0.0
  %v111 = vrot.slane %v107, 2
  %v112 = vrot.slane %v108, 2
  %115 = vst [vmem:[#allocation3] sm:$0xc0] %v111
  %116 = vst [vmem:[#allocation3 + $0x8] sm:$0xc0] %v112
  %117 = vst [vmem:[#allocation3 + $0x20] sm:$0x1] %v111
  %118 = vst [vmem:[#allocation3 + $0x28] sm:$0x1] %v112
  %v119 = vld [vmem:[#allocation2] sm:$0x77]
  %v120 = vld [vmem:[#allocation2 + $0x8] sm:$0x7]
  %123 = vst [vmem:[#allocation1] ss:$2 sm:$0xff] %v119
  %s124 = scalar_lea.vmem [#allocation1], 16
  %125 = vst [vmem:[%s124] ss:$2 sm:$0xff] %v120
  %v126 = vld.sshfl [vmem:[#allocation1] sm:$0xff pattern:$0x75316420]
  %v127 = vld.sshfl [vmem:[#allocation1 + $0x8] sm:$0xff pattern:$0x75316420]
  %v128 = vld.sshfl [vmem:[#allocation1 + $0x10] sm:$0xff pattern:$0x75316420]
  %129 = vrot.lane.b32.xlu0 %v126, 112
  %v130 = vpop.permute.xlu0 %129
  %131 = vrot.lane.b32.xlu0 %v127, 112
  %v132 = vpop.permute.xlu0 %131
  %133 = vrot.lane.b32.xlu0 %v128, 112
  %v134 = vpop.permute.xlu0 %133
  %vm135 = vcmask 916480
  %v136 = vsel %vm135, %v130, %v132
  %v137 = vsel %vm135, %v132, %v134
  %v140 = vsel %vm23, %v136, 0.0
  %v141 = vsel %vm24, %v137, 0.0
  %v144 = vrot.slane %v140, 7
  %v145 = vrot.slane %v141, 7
  %148 = vst [vmem:[#allocation3 + $0x20] sm:$0xe] %v144
  %149 = vst [vmem:[#allocation3 + $0x28] sm:$0xe] %v145
  %v150 = vld [vmem:[#allocation2] sm:$0x77]
  %v151 = vld [vmem:[#allocation2 + $0x8] sm:$0x7]
  %s154 = scalar_lea.vmem [#allocation1], 1
  %155 = vst [vmem:[%s154] ss:$2 sm:$0xff] %v150
  %s156 = scalar_lea.vmem [#allocation1], 17
  %157 = vst [vmem:[%s156] ss:$2 sm:$0xff] %v151
  %v158 = vld.sshfl [vmem:[#allocation1] sm:$0xff pattern:$0x75316420]
  %v159 = vld.sshfl [vmem:[#allocation1 + $0x8] sm:$0xff pattern:$0x75316420]
  %v160 = vld.sshfl [vmem:[#allocation1 + $0x10] sm:$0xff pattern:$0x75316420]
  %161 = vrot.lane.b32.xlu0 %v158, 111
  %v162 = vpop.permute.xlu0 %161
  %163 = vrot.lane.b32.xlu0 %v159, 111
  %v164 = vpop.permute.xlu0 %163
  %165 = vrot.lane.b32.xlu0 %v160, 111
  %v166 = vpop.permute.xlu0 %165
  %vm167 = vcmask 908288
  %v168 = vsel %vm167, %v162, %v164
  %v169 = vsel %vm167, %v164, %v166
  %172 = vst [vmem:[#allocation3 + $0x20] sm:$0x70] %v168
  %173 = vst [vmem:[#allocation3 + $0x28] sm:$0x70] %v169
  %v174 = vld [vmem:[#allocation2] sm:$0x77]
  %v175 = vld [vmem:[#allocation2 + $0x8] sm:$0x7]
  %178 = vst [vmem:[#allocation1] ss:$2 sm:$0xff] %v174
  %s179 = scalar_lea.vmem [#allocation1], 16
  %180 = vst [vmem:[%s179] ss:$2 sm:$0xff] %v175
  %v181 = vld.sshfl [vmem:[#allocation1] sm:$0xff pattern:$0x75316420]
  %v182 = vld.sshfl [vmem:[#allocation1 + $0x8] sm:$0xff pattern:$0x75316420]
  %v183 = vld.sshfl [vmem:[#allocation1 + $0x10] sm:$0xff pattern:$0x75316420]
  %184 = vrot.lane.b32.xlu0 %v181, 110
  %v185 = vpop.permute.xlu0 %184
  %186 = vrot.lane.b32.xlu0 %v182, 110
  %v187 = vpop.permute.xlu0 %186
  %188 = vrot.lane.b32.xlu0 %v183, 110
  %v189 = vpop.permute.xlu0 %188
  %vm190 = vcmask 900096
  %v191 = vsel %vm190, %v185, %v187
  %v192 = vsel %vm190, %v187, %v189
  %v195 = vsel %vm29, %v191, 0.0
  %v196 = vsel %vm30, %v192, 0.0
  %v199 = vrot.slane %v195, 1
  %v200 = vrot.slane %v196, 1
  %203 = vst [vmem:[#allocation3 + $0x20] sm:$0x80] %v199
  %204 = vst [vmem:[#allocation3 + $0x28] sm:$0x80] %v200
  %205 = vst [vmem:[#allocation3 + $0x40] sm:$0x3] %v199
  %206 = vst [vmem:[#allocation3 + $0x48] sm:$0x3] %v200
  %v207 = vld [vmem:[#allocation2] sm:$0x77]
  %v208 = vld [vmem:[#allocation2 + $0x8] sm:$0x7]
  %211 = vst [vmem:[#allocation1] ss:$2 sm:$0xff] %v207
  %s212 = scalar_lea.vmem [#allocation1], 16
  %213 = vst [vmem:[%s212] ss:$2 sm:$0xff] %v208
  %v214 = vld.sshfl [vmem:[#allocation1] sm:$0xff pattern:$0x75316420]
  %v215 = vld.sshfl [vmem:[#allocation1 + $0x8] sm:$0xff pattern:$0x75316420]
  %v216 = vld.sshfl [vmem:[#allocation1 + $0x10] sm:$0xff pattern:$0x75316420]
  %217 = vrot.lane.b32.xlu0 %v214, 96
  %v218 = vpop.permute.xlu0 %217
  %219 = vrot.lane.b32.xlu0 %v215, 96
  %v220 = vpop.permute.xlu0 %219
  %221 = vrot.lane.b32.xlu0 %v216, 96
  %v222 = vpop.permute.xlu0 %221
  %vm223 = vcmask 785408
  %v224 = vsel %vm223, %v218, %v220
  %v225 = vsel %vm223, %v220, %v222
  %v228 = vsel %vm23, %v224, 0.0
  %v229 = vsel %vm24, %v225, 0.0
  %v232 = vrot.slane %v228, 6
  %v233 = vrot.slane %v229, 6
  %236 = vst [vmem:[#allocation3 + $0x40] sm:$0x1c] %v232
  %237 = vst [vmem:[#allocation3 + $0x48] sm:$0x1c] %v233
  %v238 = vld [vmem:[#allocation2] sm:$0x77]
  %v239 = vld [vmem:[#allocation2 + $0x8] sm:$0x7]
  %242 = vst [vmem:[#allocation1] ss:$2 sm:$0xff] %v238
  %s243 = scalar_lea.vmem [#allocation1], 16
  %244 = vst [vmem:[%s243] ss:$2 sm:$0xff] %v239
  %v245 = vld.sshfl [vmem:[#allocation1] sm:$0xff pattern:$0x75316420]
  %v246 = vld.sshfl [vmem:[#allocation1 + $0x8] sm:$0xff pattern:$0x75316420]
  %v247 = vld.sshfl [vmem:[#allocation1 + $0x10] sm:$0xff pattern:$0x75316420]
  %v248 = vrot.slane %v245, 3
  %v249 = vrot.slane %v246, 3
  %v250 = vrot.slane %v247, 3
  %251 = vrot.lane.b32.xlu0 %v248, 95
  %v252 = vpop.permute.xlu0 %251
  %253 = vrot.lane.b32.xlu0 %v249, 95
  %v254 = vpop.permute.xlu0 %253
  %255 = vrot.lane.b32.xlu0 %v250, 95
  %v256 = vpop.permute.xlu0 %255
  %vm257 = vcmask 777216
  %v258 = vsel %vm257, %v252, %v254
  %v259 = vsel %vm257, %v254, %v256
  %262 = vst [vmem:[#allocation3 + $0x40] sm:$0xe0] %v258
  %263 = vst [vmem:[#allocation3 + $0x48] sm:$0xe0] %v259
  %v264 = vld [vmem:[#allocation2] sm:$0x77]
  %v265 = vld [vmem:[#allocation2 + $0x8] sm:$0x7]
  %268 = vst [vmem:[#allocation1] ss:$2 sm:$0xff] %v264
  %s269 = scalar_lea.vmem [#allocation1], 16
  %270 = vst [vmem:[%s269] ss:$2 sm:$0xff] %v265
  %v271 = vld.sshfl [vmem:[#allocation1] sm:$0xff pattern:$0x75316420]
  %v272 = vld.sshfl [vmem:[#allocation1 + $0x8] sm:$0xff pattern:$0x75316420]
  %v273 = vld.sshfl [vmem:[#allocation1 + $0x10] sm:$0xff pattern:$0x75316420]
  %274 = vrot.lane.b32.xlu0 %v271, 94
  %v275 = vpop.permute.xlu0 %274
  %276 = vrot.lane.b32.xlu0 %v272, 94
  %v277 = vpop.permute.xlu0 %276
  %278 = vrot.lane.b32.xlu0 %v273, 94
  %v279 = vpop.permute.xlu0 %278
  %vm280 = vcmask 769024
  %v281 = vsel %vm280, %v275, %v277
  %v282 = vsel %vm280, %v277, %v279
  %v285 = vsel %vm29, %v281, 0.0
  %v286 = vsel %vm30, %v282, 0.0
  %287 = vst [vmem:[#allocation3 + $0x60] sm:$0x7] %v285
  %288 = vst [vmem:[#allocation3 + $0x68] sm:$0x7] %v286
  %s289 = scalar_lea.vmem %s0, 8
  %v290 = vld [vmem:[%s289] sm:$0x77]
  %292 = vrot.lane.b32.xlu0 %v290, 17
  %v293 = vpop.permute.xlu0 %292
  %v294 = vrot.slane %v293, 4
  %v295 = vsel %vm39, %v294, %v293
  %298 = vst.msk [vmem:[#allocation2] sm:$0x77] %vm45, %v295
  %299 = vst.msk [vmem:[#allocation2 + $0x8] sm:$0x7] %vm47, %v294
  %v300 = vld [vmem:[#allocation2] sm:$0x77]
  %302 = vst [vmem:[#allocation1] ss:$2 sm:$0xff] %v300
  %v303 = vld.sshfl [vmem:[#allocation1] sm:$0xff pattern:$0x75316420]
  %v304 = vld.sshfl [vmem:[#allocation1 + $0x8] sm:$0xff pattern:$0x75316420]
  %v307 = vsel %vm23, %v303, 0.0
  %v308 = vsel %vm24, %v304, 0.0
  %309 = vst [vmem:[#allocation3 + $0x10] sm:$0x7] %v307
  %310 = vst [vmem:[#allocation3 + $0x18] sm:$0x7] %v308
  %v311 = vld [vmem:[#allocation2] sm:$0x77]
  %v312 = vld [vmem:[#allocation2 + $0x8] sm:$0x7]
  %315 = vst [vmem:[#allocation1] ss:$2 sm:$0xff] %v311
  %s316 = scalar_lea.vmem [#allocation1], 16
  %317 = vst [vmem:[%s316] ss:$2 sm:$0xff] %v312
  %v318 = vld.sshfl [vmem:[#allocation1] sm:$0xff pattern:$0x75316420]
  %v319 = vld.sshfl [vmem:[#allocation1 + $0x8] sm:$0xff pattern:$0x75316420]
  %v320 = vld.sshfl [vmem:[#allocation1 + $0x10] sm:$0xff pattern:$0x75316420]
  %v321 = vrot.slane %v318, 5
  %v322 = vrot.slane %v319, 5
  %v323 = vrot.slane %v320, 5
  %324 = vrot.lane.b32.xlu0 %v321, 127
  %v325 = vpop.permute.xlu0 %324
  %326 = vrot.lane.b32.xlu0 %v322, 127
  %v327 = vpop.permute.xlu0 %326
  %328 = vrot.lane.b32.xlu0 %v323, 127
  %v329 = vpop.permute.xlu0 %328
  %v330 = vsel %vm79, %v325, %v327
  %v331 = vsel %vm79, %v327, %v329
  %334 = vst [vmem:[#allocation3 + $0x10] sm:$0x38] %v330
  %335 = vst [vmem:[#allocation3 + $0x18] sm:$0x38] %v331
  %v336 = vld [vmem:[#allocation2] sm:$0x77]
  %v337 = vld [vmem:[#allocation2 + $0x8] sm:$0x7]
  %340 = vst [vmem:[#allocation1] ss:$2 sm:$0xff] %v336
  %s341 = scalar_lea.vmem [#allocation1], 16
  %342 = vst [vmem:[%s341] ss:$2 sm:$0xff] %v337
  %v343 = vld.sshfl [vmem:[#allocation1] sm:$0xff pattern:$0x75316420]
  %v344 = vld.sshfl [vmem:[#allocation1 + $0x8] sm:$0xff pattern:$0x75316420]
  %v345 = vld.sshfl [vmem:[#allocation1 + $0x10] sm:$0xff pattern:$0x75316420]
  %346 = vrot.lane.b32.xlu0 %v343, 126
  %v347 = vpop.permute.xlu0 %346
  %348 = vrot.lane.b32.xlu0 %v344, 126
  %v349 = vpop.permute.xlu0 %348
  %350 = vrot.lane.b32.xlu0 %v345, 126
  %v351 = vpop.permute.xlu0 %350
  %v352 = vsel %vm102, %v347, %v349
  %v353 = vsel %vm102, %v349, %v351
  %v356 = vsel %vm29, %v352, 0.0
  %v357 = vsel %vm30, %v353, 0.0
  %v360 = vrot.slane %v356, 2
  %v361 = vrot.slane %v357, 2
  %364 = vst [vmem:[#allocation3 + $0x10] sm:$0xc0] %v360
  %365 = vst [vmem:[#allocation3 + $0x18] sm:$0xc0] %v361
  %366 = vst [vmem:[#allocation3 + $0x30] sm:$0x1] %v360
  %367 = vst [vmem:[#allocation3 + $0x38] sm:$0x1] %v361
  %v368 = vld [vmem:[#allocation2] sm:$0x77]
  %v369 = vld [vmem:[#allocation2 + $0x8] sm:$0x7]
  %372 = vst [vmem:[#allocation1] ss:$2 sm:$0xff] %v368
  %s373 = scalar_lea.vmem [#allocation1], 16
  %374 = vst [vmem:[%s373] ss:$2 sm:$0xff] %v369
  %v375 = vld.sshfl [vmem:[#allocation1] sm:$0xff pattern:$0x75316420]
  %v376 = vld.sshfl [vmem:[#allocation1 + $0x8] sm:$0xff pattern:$0x75316420]
  %v377 = vld.sshfl [vmem:[#allocation1 + $0x10] sm:$0xff pattern:$0x75316420]
  %378 = vrot.lane.b32.xlu0 %v375, 112
  %v379 = vpop.permute.xlu0 %378
  %380 = vrot.lane.b32.xlu0 %v376, 112
  %v381 = vpop.permute.xlu0 %380
  %382 = vrot.lane.b32.xlu0 %v377, 112
  %v383 = vpop.permute.xlu0 %382
  %v384 = vsel %vm135, %v379, %v381
  %v385 = vsel %vm135, %v381, %v383
  %v388 = vsel %vm23, %v384, 0.0
  %v389 = vsel %vm24, %v385, 0.0
  %v392 = vrot.slane %v388, 7
  %v393 = vrot.slane %v389, 7
  %396 = vst [vmem:[#allocation3 + $0x30] sm:$0xe] %v392
  %397 = vst [vmem:[#allocation3 + $0x38] sm:$0xe] %v393
  %v398 = vld [vmem:[#allocation2] sm:$0x77]
  %v399 = vld [vmem:[#allocation2 + $0x8] sm:$0x7]
  %s402 = scalar_lea.vmem [#allocation1], 1
  %403 = vst [vmem:[%s402] ss:$2 sm:$0xff] %v398
  %s404 = scalar_lea.vmem [#allocation1], 17
  %405 = vst [vmem:[%s404] ss:$2 sm:$0xff] %v399
  %v406 = vld.sshfl [vmem:[#allocation1] sm:$0xff pattern:$0x75316420]
  %v407 = vld.sshfl [vmem:[#allocation1 + $0x8] sm:$0xff pattern:$0x75316420]
  %v408 = vld.sshfl [vmem:[#allocation1 + $0x10] sm:$0xff pattern:$0x75316420]
  %409 = vrot.lane.b32.xlu0 %v406, 111
  %v410 = vpop.permute.xlu0 %409
  %411 = vrot.lane.b32.xlu0 %v407, 111
  %v412 = vpop.permute.xlu0 %411
  %413 = vrot.lane.b32.xlu0 %v408, 111
  %v414 = vpop.permute.xlu0 %413
  %v415 = vsel %vm167, %v410, %v412
  %v416 = vsel %vm167, %v412, %v414
  %419 = vst [vmem:[#allocation3 + $0x30] sm:$0x70] %v415
  %420 = vst [vmem:[#allocation3 + $0x38] sm:$0x70] %v416
  %v421 = vld [vmem:[#allocation2] sm:$0x77]
  %v422 = vld [vmem:[#allocation2 + $0x8] sm:$0x7]
  %425 = vst [vmem:[#allocation1] ss:$2 sm:$0xff] %v421
  %s426 = scalar_lea.vmem [#allocation1], 16
  %427 = vst [vmem:[%s426] ss:$2 sm:$0xff] %v422
  %v428 = vld.sshfl [vmem:[#allocation1] sm:$0xff pattern:$0x75316420]
  %v429 = vld.sshfl [vmem:[#allocation1 + $0x8] sm:$0xff pattern:$0x75316420]
  %v430 = vld.sshfl [vmem:[#allocation1 + $0x10] sm:$0xff pattern:$0x75316420]
  %431 = vrot.lane.b32.xlu0 %v428, 110
  %v432 = vpop.permute.xlu0 %431
  %433 = vrot.lane.b32.xlu0 %v429, 110
  %v434 = vpop.permute.xlu0 %433
  %435 = vrot.lane.b32.xlu0 %v430, 110
  %v436 = vpop.permute.xlu0 %435
  %v437 = vsel %vm190, %v432, %v434
  %v438 = vsel %vm190, %v434, %v436
  %v441 = vsel %vm29, %v437, 0.0
  %v442 = vsel %vm30, %v438, 0.0
  %v445 = vrot.slane %v441, 1
  %v446 = vrot.slane %v442, 1
  %449 = vst [vmem:[#allocation3 + $0x30] sm:$0x80] %v445
  %450 = vst [vmem:[#allocation3 + $0x38] sm:$0x80] %v446
  %451 = vst [vmem:[#allocation3 + $0x50] sm:$0x3] %v445
  %452 = vst [vmem:[#allocation3 + $0x58] sm:$0x3] %v446
  %v453 = vld [vmem:[#allocation2] sm:$0x77]
  %v454 = vld [vmem:[#allocation2 + $0x8] sm:$0x7]
  %457 = vst [vmem:[#allocation1] ss:$2 sm:$0xff] %v453
  %s458 = scalar_lea.vmem [#allocation1], 16
  %459 = vst [vmem:[%s458] ss:$2 sm:$0xff] %v454
  %v460 = vld.sshfl [vmem:[#allocation1] sm:$0xff pattern:$0x75316420]
  %v461 = vld.sshfl [vmem:[#allocation1 + $0x8] sm:$0xff pattern:$0x75316420]
  %v462 = vld.sshfl [vmem:[#allocation1 + $0x10] sm:$0xff pattern:$0x75316420]
  %463 = vrot.lane.b32.xlu0 %v460, 96
  %v464 = vpop.permute.xlu0 %463
  %465 = vrot.lane.b32.xlu0 %v461, 96
  %v466 = vpop.permute.xlu0 %465
  %467 = vrot.lane.b32.xlu0 %v462, 96
  %v468 = vpop.permute.xlu0 %467
  %v469 = vsel %vm223, %v464, %v466
  %v470 = vsel %vm223, %v466, %v468
  %v473 = vsel %vm23, %v469, 0.0
  %v474 = vsel %vm24, %v470, 0.0
  %v477 = vrot.slane %v473, 6
  %v478 = vrot.slane %v474, 6
  %481 = vst [vmem:[#allocation3 + $0x50] sm:$0x1c] %v477
  %482 = vst [vmem:[#allocation3 + $0x58] sm:$0x1c] %v478
  %v483 = vld [vmem:[#allocation2] sm:$0x77]
  %v484 = vld [vmem:[#allocation2 + $0x8] sm:$0x7]
  %487 = vst [vmem:[#allocation1] ss:$2 sm:$0xff] %v483
  %s488 = scalar_lea.vmem [#allocation1], 16
  %489 = vst [vmem:[%s488] ss:$2 sm:$0xff] %v484
  %v490 = vld.sshfl [vmem:[#allocation1] sm:$0xff pattern:$0x75316420]
  %v491 = vld.sshfl [vmem:[#allocation1 + $0x8] sm:$0xff pattern:$0x75316420]
  %v492 = vld.sshfl [vmem:[#allocation1 + $0x10] sm:$0xff pattern:$0x75316420]
  %v493 = vrot.slane %v490, 3
  %v494 = vrot.slane %v491, 3
  %v495 = vrot.slane %v492, 3
  %496 = vrot.lane.b32.xlu0 %v493, 95
  %v497 = vpop.permute.xlu0 %496
  %498 = vrot.lane.b32.xlu0 %v494, 95
  %v499 = vpop.permute.xlu0 %498
  %500 = vrot.lane.b32.xlu0 %v495, 95
  %v501 = vpop.permute.xlu0 %500
  %v502 = vsel %vm257, %v497, %v499
  %v503 = vsel %vm257, %v499, %v501
  %506 = vst [vmem:[#allocation3 + $0x50] sm:$0xe0] %v502
  %507 = vst [vmem:[#allocation3 + $0x58] sm:$0xe0] %v503
  %v508 = vld [vmem:[#allocation2] sm:$0x77]
  %v509 = vld [vmem:[#allocation2 + $0x8] sm:$0x7]
  %512 = vst [vmem:[#allocation1] ss:$2 sm:$0xff] %v508
  %s513 = scalar_lea.vmem [#allocation1], 16
  %514 = vst [vmem:[%s513] ss:$2 sm:$0xff] %v509
  %v515 = vld.sshfl [vmem:[#allocation1] sm:$0xff pattern:$0x75316420]
  %v516 = vld.sshfl [vmem:[#allocation1 + $0x8] sm:$0xff pattern:$0x75316420]
  %v517 = vld.sshfl [vmem:[#allocation1 + $0x10] sm:$0xff pattern:$0x75316420]
  %518 = vrot.lane.b32.xlu0 %v515, 94
  %v519 = vpop.permute.xlu0 %518
  %520 = vrot.lane.b32.xlu0 %v516, 94
  %v521 = vpop.permute.xlu0 %520
  %522 = vrot.lane.b32.xlu0 %v517, 94
  %v523 = vpop.permute.xlu0 %522
  %v524 = vsel %vm280, %v519, %v521
  %v525 = vsel %vm280, %v521, %v523
  %v528 = vsel %vm29, %v524, 0.0
  %v529 = vsel %vm30, %v525, 0.0
  %530 = vst [vmem:[#allocation3 + $0x70] sm:$0x7] %v528
  %531 = vst [vmem:[#allocation3 + $0x78] sm:$0x7] %v529
  %v532 = vld [vmem:[%s1] sm:$0xff]
  %v533 = vld [vmem:[#allocation3] sm:$0xff]
  %v534 = vld [vmem:[#allocation3 + $0x8] sm:$0xff]
  %v535 = vld [vmem:[#allocation3 + $0x10] sm:$0xff]
  %v536 = vld [vmem:[#allocation3 + $0x18] sm:$0xff]
  %v537 = vld [vmem:[#allocation3 + $0x20] sm:$0xff]
  %v538 = vld [vmem:[#allocation3 + $0x28] sm:$0xff]
  %v539 = vld [vmem:[#allocation3 + $0x30] sm:$0xff]
  %v540 = vld [vmem:[#allocation3 + $0x38] sm:$0xff]
  %v541 = vld [vmem:[#allocation3 + $0x40] sm:$0xff]
  %v542 = vld [vmem:[#allocation3 + $0x48] sm:$0xff]
  %v543 = vld [vmem:[#allocation3 + $0x50] sm:$0xff]
  %v544 = vld [vmem:[#allocation3 + $0x58] sm:$0xff]
  %v545 = vld [vmem:[#allocation3 + $0x60] sm:$0x7]
  %v546 = vld [vmem:[#allocation3 + $0x68] sm:$0x7]
  %v547 = vld [vmem:[#allocation3 + $0x70] sm:$0x7]
  %v548 = vld [vmem:[#allocation3 + $0x78] sm:$0x7]
  %v549 = vld [vmem:[%s2] sm:$0xff]
  %551 = vset.pattern.permute.xlu0 0
  %552 = vperm.xlu0 %551, %v549
  %v553 = vpop.permute.xlu0 %552
  %vm555 = vcmask 220160
  %v557 = vsel %vm555, %v532, 0
  %vm559 = vcmask 1042432
  %v561 = vsel %vm559, %v545, 0
  %v564 = vsel %vm559, %v546, 0
  %v567 = vsel %vm559, %v547, 0
  %v570 = vsel %vm559, %v548, 0
  %572 = vmatpush.msra.mxu0 0.0
  %573 = vmatpush.msra.mxu0 0.0
  %574 = vmatpush.msra.mxu0 0.0
  %575 = vmatpush.msra.mxu0 0.0
  %576 = vmatpush.msra.mxu0 0.0
  %577 = vmatpush.msra.mxu0 0.0
  %578 = vmatpush.msra.mxu0 0.0
  %579 = vmatpush.msra.mxu0 0.0
  %580 = vmatpush.msra.mxu0 0.0
  %581 = vmatpush.msra.mxu0 0.0
  %582 = vmatpush.msra.mxu0 0.0
  %583 = vmatpush.msra.mxu0 0.0
  %584 = vmatpush.msra.mxu0 %v561
  %585 = vmatpush.msra.mxu0 %v541
  %586 = vmatpush.msra.mxu0 %v537
  %587 = vmatpush.msra.mxu0 %v533
  %588 = vmatmul.f32.gmra.mxu0 %v557
  %v589 = vpop.f32.mrf.mxu0
  %v590 = vadd.f32 %v553, %v589
  %591 = vdwg.mxu0
  %592 = vmatpush.msra.mxu0 0.0
  %593 = vmatpush.msra.mxu0 0.0
  %594 = vmatpush.msra.mxu0 0.0
  %595 = vmatpush.msra.mxu0 0.0
  %596 = vmatpush.msra.mxu0 0.0
  %597 = vmatpush.msra.mxu0 0.0
  %598 = vmatpush.msra.mxu0 0.0
  %599 = vmatpush.msra.mxu0 0.0
  %600 = vmatpush.msra.mxu0 0.0
  %601 = vmatpush.msra.mxu0 0.0
  %602 = vmatpush.msra.mxu0 0.0
  %603 = vmatpush.msra.mxu0 0.0
  %604 = vmatpush.msra.mxu0 %v564
  %605 = vmatpush.msra.mxu0 %v542
  %606 = vmatpush.msra.mxu0 %v538
  %607 = vmatpush.msra.mxu0 %v534
  %608 = vmatmul.f32.gmra.mxu0 %v557
  %v609 = vpop.f32.mrf.mxu0
  %v610 = vadd.f32 %v553, %v609
  %611 = vdwg.mxu0
  %612 = vmatpush.msra.mxu0 0.0
  %613 = vmatpush.msra.mxu0 0.0
  %614 = vmatpush.msra.mxu0 0.0
  %615 = vmatpush.msra.mxu0 0.0
  %616 = vmatpush.msra.mxu0 0.0
  %617 = vmatpush.msra.mxu0 0.0
  %618 = vmatpush.msra.mxu0 0.0
  %619 = vmatpush.msra.mxu0 0.0
  %620 = vmatpush.msra.mxu0 0.0
  %621 = vmatpush.msra.mxu0 0.0
  %622 = vmatpush.msra.mxu0 0.0
  %623 = vmatpush.msra.mxu0 0.0
  %624 = vmatpush.msra.mxu0 %v567
  %625 = vmatpush.msra.mxu0 %v543
  %626 = vmatpush.msra.mxu0 %v539
  %627 = vmatpush.msra.mxu0 %v535
  %628 = vmatmul.f32.gmra.mxu0 %v557
  %v629 = vpop.f32.mrf.mxu0
  %v630 = vadd.f32 %v553, %v629
  %631 = vdwg.mxu0
  %632 = vmatpush.msra.mxu0 0.0
  %633 = vmatpush.msra.mxu0 0.0
  %634 = vmatpush.msra.mxu0 0.0
  %635 = vmatpush.msra.mxu0 0.0
  %636 = vmatpush.msra.mxu0 0.0
  %637 = vmatpush.msra.mxu0 0.0
  %638 = vmatpush.msra.mxu0 0.0
  %639 = vmatpush.msra.mxu0 0.0
  %640 = vmatpush.msra.mxu0 0.0
  %641 = vmatpush.msra.mxu0 0.0
  %642 = vmatpush.msra.mxu0 0.0
  %643 = vmatpush.msra.mxu0 0.0
  %644 = vmatpush.msra.mxu0 %v570
  %645 = vmatpush.msra.mxu0 %v544
  %646 = vmatpush.msra.mxu0 %v540
  %647 = vmatpush.msra.mxu0 %v536
  %648 = vmatmul.f32.gmra.mxu0 %v557
  %v649 = vpop.f32.mrf.mxu0
  %v650 = vadd.f32 %v553, %v649
  %651 = vdwg.mxu0
  %v652 = vmax.f32 %v590, 0.0
  %v653 = vmax.f32 %v610, 0.0
  %v654 = vmax.f32 %v630, 0.0
  %v655 = vmax.f32 %v650, 0.0
  %v656 = vmin.f32 %v652, 6.0
  %v657 = vmin.f32 %v653, 6.0
  %v658 = vmin.f32 %v654, 6.0
  %v659 = vmin.f32 %v655, 6.0
  %v660 = vmul.f32 %v656, 0.16666667
  %v661 = vmul.f32 %v657, 0.16666667
  %v662 = vmul.f32 %v658, 0.16666667
  %v663 = vmul.f32 %v659, 0.16666667
  %664 = vst [vmem:[%s3] sm:$0xff] %v660
  %665 = vst [vmem:[%s3 + $0x8] sm:$0xff] %v661
  %s666 = scalar_lea.vmem %s3, 16
  %667 = vst [vmem:[%s666] sm:$0xff] %v662
  %668 = vst [vmem:[%s666 + $0x8] sm:$0xff] %v663
  // Predicated region
  $region14: #{conv_transpose_hardsigmoid.1} parent=0 // pred_check
    _
  $region15: #{conv_transpose_hardsigmoid.1} parent=0 // pred_check_branch
    %670 = sbr.rel (0) target = $region17
  $region16: #{conv_transpose_hardsigmoid.1} parent=0 // pred_region
    _
  $region17: #{conv_transpose_hardsigmoid.1} parent=0 // pred_fallthru
    _
  // Predicated region
  $region18: #{conv_transpose_hardsigmoid.1} parent=0 // pred_check
    _
  $region19: #{conv_transpose_hardsigmoid.1} parent=0 // pred_check_branch
    %672 = sbr.rel (0) target = $region21
  $region20: #{conv_transpose_hardsigmoid.1} parent=0 // pred_region
    _
  $region21: #{conv_transpose_hardsigmoid.1} parent=0 // pred_fallthru
    _

</llo_original>
